<compile_context>
chip_gen: v7x
topology: tpu7x:2x2x1
jax: 0.10.0
libtpu: 0.0.40
codegen_flags: <defaults>
</compile_context>

<pallas_src>
import functools
import math

import jax
import jax.numpy as jnp
from jax.experimental import pallas as pl
from jax.experimental.pallas import tpu as pltpu

BN_EPS = 1e-5
L2_EPS = 1e-12
LANE = 128


def _round_up(n, m):
    return ((n + m - 1) // m) * m


def _fcnet_kernel(x_ref, w0_ref, w1_ref, w2_ref, vec_ref, o_ref):
    # vec_ref rows: 0=gamma0, 1=beta0, 2=gamma1, 3=beta1, 4=final bias (all lane-padded
    # to 128 with zeros; padded gamma/beta MUST be zero -> padded columns stay 0).
    x = x_ref[...].astype(jnp.float32)                        # (B, 128) lane-dense
    inv_b = 1.0 / x.shape[0]

    def linear_bn_relu(h_in, w_ref, g_row, be_row):
        width = w_ref.shape[1]                                # 128 (lane-dense)
        # Linear bias omitted: exactly cancelled by the BN mean subtraction.
        h = jnp.dot(h_in, w_ref[...], preferred_element_type=jnp.float32)  # (B, width)
        g = vec_ref[g_row:g_row + 1, :width]
        be = vec_ref[be_row:be_row + 1, :width]
        # Single-pass biased batch statistics (training-mode BatchNorm1d).
        mean = jnp.sum(h, axis=0, keepdims=True) * inv_b
        msq = jnp.sum(h * h, axis=0, keepdims=True) * inv_b
        var = jnp.maximum(msq - mean * mean, 0.0)
        # Folded BN: scale/shift only; rsqrt sits on the EUP slot.
        scale = g * jax.lax.rsqrt(var + BN_EPS)
        shift = be - mean * scale
        return jnp.maximum(h * scale + shift, 0.0)            # ReLU

    h = linear_bn_relu(x, w0_ref, 0, 1)                       # (B, 128)
    h = linear_bn_relu(h, w1_ref, 2, 3)                       # (B, 128)

    # Final plain Linear layer ('Linear_layer' branch), lane-padded output width.
    d_outp = w2_ref.shape[1]
    out = jnp.dot(h, w2_ref[...], preferred_element_type=jnp.float32) \
        + vec_ref[4:5, :d_outp]

    # out_scaling == 'L2': F.normalize(out, dim=-1) == out / max(||out||_2, 1e-12).
    # Padded lanes are exactly zero, so they do not perturb the norm.
    sumsq = jnp.sum(out * out, axis=-1, keepdims=True)
    out = out * jax.lax.rsqrt(jnp.maximum(sumsq, L2_EPS * L2_EPS))

    o_ref[...] = out.astype(o_ref.dtype)


def prepare_params(params):
    """One-time packing/padding of the weights (hoisted out of the per-call path).

    Returns (w0p, w1p, w2p, vec, d_out):
      * weights zero-padded to lane-dense (multiples of 128) K and N dims,
      * a single (8, 128) slab holding gamma0, beta0, gamma1, beta1, final bias
        (padded entries are zero -> padded activation columns are exactly zero).
    """
    (w0, b0, g0, be0, w1, b1, g1, be1, w2, b2) = params
    del b0, b1  # hidden-layer biases are exactly absorbed by training-mode BN

    d_in = w0.shape[0]
    d_h0 = w0.shape[1]
    d_h1 = w1.shape[1]
    d_out = w2.shape[1]

    d_in_p = _round_up(max(d_in, LANE), LANE)
    d_h0_p = _round_up(max(d_h0, LANE), LANE)
    d_h1_p = _round_up(max(d_h1, LANE), LANE)
    d_out_p = _round_up(max(d_out, LANE), LANE)

    w0p = jnp.zeros((d_in_p, d_h0_p), jnp.float32).at[:d_in, :d_h0].set(w0)
    w1p = jnp.zeros((d_h0_p, d_h1_p), jnp.float32).at[:d_h0, :d_h1].set(w1)
    w2p = jnp.zeros((d_h1_p, d_out_p), jnp.float32).at[:d_h1, :d_out].set(w2)

    slab_w = max(d_h0_p, d_h1_p, d_out_p)
    vec = jnp.zeros((8, slab_w), jnp.float32)
    vec = vec.at[0, :d_h0].set(g0.reshape(-1))
    vec = vec.at[1, :d_h0].set(be0.reshape(-1))
    vec = vec.at[2, :d_h1].set(g1.reshape(-1))
    vec = vec.at[3, :d_h1].set(be1.reshape(-1))
    vec = vec.at[4, :d_out].set(b2.reshape(-1))

    return (jax.device_put(w0p), jax.device_put(w1p), jax.device_put(w2p),
            jax.device_put(vec), d_out)


@functools.partial(jax.jit, static_argnames=("d_out",))
def fc_net_batch_forward(x, prepared, *, d_out):
    """x: (B, 1, 2*in_dim) or (B, 2*in_dim).  Returns (B, 1, 2*out_dim)."""
    w0p, w1p, w2p, vec = prepared

    x2d = jnp.squeeze(x)                                      # torch's x.squeeze()
    if x2d.ndim == 1:
        x2d = x2d[None, :]
    B, d_in = x2d.shape

    # Lane-dense input: pad the feature dim to w0p's (padded) K with zero columns
    # (matching zero K rows in w0p), so the x tile loads unmasked.
    d_in_p = w0p.shape[0]
    x_pad = jnp.zeros((B, d_in_p), jnp.float32).at[:, :d_in].set(
        x2d.astype(jnp.float32))

    d_out_pad = w2p.shape[1]
    full = lambda shape: pl.BlockSpec(shape, lambda i, _s=shape: (0,) * len(_s))

    out_pad = pl.pallas_call(
        _fcnet_kernel,
        out_shape=jax.ShapeDtypeStruct((B, d_out_pad), jnp.float32),
        grid=(1,),
        in_specs=[
            full(x_pad.shape),
            full(w0p.shape),
            full(w1p.shape),
            full(w2p.shape),
            full(vec.shape),
        ],
        out_specs=full((B, d_out_pad)),
        compiler_params=pltpu.CompilerParams(
            dimension_semantics=("arbitrary",),
            vmem_limit_bytes=4 * 1024 * 1024),
    )(x_pad, w0p, w1p, w2p, vec)

    # torch: out.unsqueeze(1); drop the lane padding.
    return out_pad[:, None, :d_out]


def init_params(key, in_dim, hidden_dims, out_dim):
    """Deterministic init matching the layer shapes of fc_net_batch (real / 'fc').

    linear_layer_wrapper doubles dims: Linear(2*d_in, 2*d_out).
    Weights stored transposed (in, out) for direct x @ W; biases/BN params as (1, d).
    """
    dims = [2 * in_dim] + [2 * h for h in hidden_dims] + [2 * out_dim]
    params = []
    for li in range(len(dims) - 1):
        d_i, d_o = dims[li], dims[li + 1]
        key, kw, kb = jax.random.split(key, 3)
        bound = 1.0 / math.sqrt(d_i)   # PyTorch nn.Linear default init range
        w = jax.random.uniform(kw, (d_i, d_o), jnp.float32, -bound, bound)
        b = jax.random.uniform(kb, (1, d_o), jnp.float32, -bound, bound)
        params.append(w)
        params.append(b)
        if li < len(dims) - 2:  # hidden layers also carry BatchNorm gamma/beta
            params.append(jnp.ones((1, d_o), jnp.float32))    # gamma
            params.append(jnp.zeros((1, d_o), jnp.float32))   # beta
    return tuple(params)


if __name__ == "__main__":
    # Small shapes consistent with the module: in_dim=16, hidden_dims=[32, 32], out_dim=8.
    in_dim, hidden_dims, out_dim = 16, [32, 32], 8
    B = 64  # multiple of 8 sublanes; training-mode BN uses the full batch

    key = jax.random.PRNGKey(0)
    key, kx = jax.random.split(key)
    x = jax.random.normal(kx, (B, 1, 2 * in_dim), dtype=jnp.float32)

    params = init_params(key, in_dim, hidden_dims, out_dim)
    w0p, w1p, w2p, vec, d_out = prepare_params(params)   # one-time packing/padding

    out = fc_net_batch_forward(x, (w0p, w1p, w2p, vec), d_out=d_out)
    jax.block_until_ready(out)

    assert out.shape == (B, 1, 2 * out_dim), out.shape
    assert bool(jnp.all(jnp.isfinite(out)))
    # Sanity: rows should be (approximately) unit L2 norm after F.normalize.
    norms = jnp.linalg.norm(out[:, 0, :], axis=-1)
    assert bool(jnp.all(jnp.abs(norms - 1.0) < 1e-4)), norms
    print("KERNEL_OK")
</pallas_src>

<mosaic_0001>
module attributes {stable_mosaic.version = 11 : i64} {
  func.func @_fcnet_kernel(%arg0: i32, %arg1: memref<64x128xf32, #tpu.memory_space<vmem>>, %arg2: memref<128x128xf32, #tpu.memory_space<vmem>>, %arg3: memref<128x128xf32, #tpu.memory_space<vmem>>, %arg4: memref<128x128xf32, #tpu.memory_space<vmem>>, %arg5: memref<8x128xf32, #tpu.memory_space<vmem>>, %arg6: memref<64x128xf32, #tpu.memory_space<vmem>>) attributes {dimension_semantics = [#tpu.dimension_semantics<arbitrary>], iteration_bounds = array<i64: 1>, scalar_prefetch = 0 : i64, scratch_operands = 0 : i64, tpu.core_type = #tpu.core_type<tc>, window_params = [{pipeline_mode = #tpu.pipeline_mode<synchronous>, transform_indices = @transform_0, window_bounds = array<i64: 64, 128>}, {pipeline_mode = #tpu.pipeline_mode<synchronous>, transform_indices = @transform_1, window_bounds = array<i64: 128, 128>}, {pipeline_mode = #tpu.pipeline_mode<synchronous>, transform_indices = @transform_2, window_bounds = array<i64: 128, 128>}, {pipeline_mode = #tpu.pipeline_mode<synchronous>, transform_indices = @transform_3, window_bounds = array<i64: 128, 128>}, {pipeline_mode = #tpu.pipeline_mode<synchronous>, transform_indices = @transform_4, window_bounds = array<i64: 8, 128>}, {pipeline_mode = #tpu.pipeline_mode<synchronous>, transform_indices = @transform_5, window_bounds = array<i64: 64, 128>}]} {
    %c0 = arith.constant 0 : index
    %c0_0 = arith.constant 0 : index
    %0 = vector.load %arg1[%c0, %c0_0] : memref<64x128xf32, #tpu.memory_space<vmem>>, vector<64x128xf32>
    %c0_1 = arith.constant 0 : index
    %c0_2 = arith.constant 0 : index
    %1 = vector.load %arg2[%c0_1, %c0_2] : memref<128x128xf32, #tpu.memory_space<vmem>>, vector<128x128xf32>
    %cst = arith.constant dense<0.000000e+00> : vector<64x128xf32>
    %2 = tpu.matmul %0, %1, %cst {dimension_numbers = #tpu.dot_dimension_numbers<[1], [0], [0], [1], [0, 0, 1, 1], [], []>} : vector<64x128xf32>, vector<128x128xf32>, vector<64x128xf32> -> vector<64x128xf32>
    %c0_3 = arith.constant 0 : index
    %c0_4 = arith.constant 0 : index
    %3 = vector.load %arg5[%c0_3, %c0_4] : memref<8x128xf32, #tpu.memory_space<vmem>>, vector<1x128xf32>
    %c1 = arith.constant 1 : index
    %c0_5 = arith.constant 0 : index
    %4 = vector.load %arg5[%c1, %c0_5] : memref<8x128xf32, #tpu.memory_space<vmem>>, vector<1x128xf32>
    %cst_6 = arith.constant dense<0.000000e+00> : vector<128xf32>
    %5 = vector.multi_reduction <add>, %2, %cst_6 [0] : vector<64x128xf32> to vector<128xf32>
    %6 = vector.shape_cast %5 : vector<128xf32> to vector<1x128xf32>
    %cst_7 = arith.constant 1.562500e-02 : f32
    %7 = vector.broadcast %cst_7 : f32 to vector<1x128xf32>
    %8 = arith.mulf %6, %7 : vector<1x128xf32>
    %9 = arith.mulf %2, %2 : vector<64x128xf32>
    %cst_8 = arith.constant dense<0.000000e+00> : vector<128xf32>
    %10 = vector.multi_reduction <add>, %9, %cst_8 [0] : vector<64x128xf32> to vector<128xf32>
    %11 = vector.shape_cast %10 : vector<128xf32> to vector<1x128xf32>
    %cst_9 = arith.constant 1.562500e-02 : f32
    %12 = vector.broadcast %cst_9 : f32 to vector<1x128xf32>
    %13 = arith.mulf %11, %12 : vector<1x128xf32>
    %14 = arith.mulf %8, %8 : vector<1x128xf32>
    %15 = arith.subf %13, %14 : vector<1x128xf32>
    %cst_10 = arith.constant 0.000000e+00 : f32
    %16 = vector.broadcast %cst_10 : f32 to vector<1x128xf32>
    %17 = arith.maximumf %15, %16 : vector<1x128xf32>
    %cst_11 = arith.constant 9.99999974E-6 : f32
    %18 = vector.broadcast %cst_11 : f32 to vector<1x128xf32>
    %19 = arith.addf %17, %18 : vector<1x128xf32>
    %20 = math.rsqrt %19 : vector<1x128xf32>
    %21 = arith.mulf %3, %20 : vector<1x128xf32>
    %22 = arith.mulf %8, %21 : vector<1x128xf32>
    %23 = arith.subf %4, %22 : vector<1x128xf32>
    %24 = vector.broadcast %21 : vector<1x128xf32> to vector<64x128xf32>
    %25 = arith.mulf %2, %24 : vector<64x128xf32>
    %26 = vector.broadcast %23 : vector<1x128xf32> to vector<64x128xf32>
    %27 = arith.addf %25, %26 : vector<64x128xf32>
    %cst_12 = arith.constant 0.000000e+00 : f32
    %28 = vector.broadcast %cst_12 : f32 to vector<64x128xf32>
    %29 = arith.maximumf %27, %28 : vector<64x128xf32>
    %c0_13 = arith.constant 0 : index
    %c0_14 = arith.constant 0 : index
    %30 = vector.load %arg3[%c0_13, %c0_14] : memref<128x128xf32, #tpu.memory_space<vmem>>, vector<128x128xf32>
    %cst_15 = arith.constant dense<0.000000e+00> : vector<64x128xf32>
    %31 = tpu.matmul %29, %30, %cst_15 {dimension_numbers = #tpu.dot_dimension_numbers<[1], [0], [0], [1], [0, 0, 1, 1], [], []>} : vector<64x128xf32>, vector<128x128xf32>, vector<64x128xf32> -> vector<64x128xf32>
    %c2 = arith.constant 2 : index
    %c0_16 = arith.constant 0 : index
    %32 = vector.load %arg5[%c2, %c0_16] : memref<8x128xf32, #tpu.memory_space<vmem>>, vector<1x128xf32>
    %c3 = arith.constant 3 : index
    %c0_17 = arith.constant 0 : index
    %33 = vector.load %arg5[%c3, %c0_17] : memref<8x128xf32, #tpu.memory_space<vmem>>, vector<1x128xf32>
    %cst_18 = arith.constant dense<0.000000e+00> : vector<128xf32>
    %34 = vector.multi_reduction <add>, %31, %cst_18 [0] : vector<64x128xf32> to vector<128xf32>
    %35 = vector.shape_cast %34 : vector<128xf32> to vector<1x128xf32>
    %cst_19 = arith.constant 1.562500e-02 : f32
    %36 = vector.broadcast %cst_19 : f32 to vector<1x128xf32>
    %37 = arith.mulf %35, %36 : vector<1x128xf32>
    %38 = arith.mulf %31, %31 : vector<64x128xf32>
    %cst_20 = arith.constant dense<0.000000e+00> : vector<128xf32>
    %39 = vector.multi_reduction <add>, %38, %cst_20 [0] : vector<64x128xf32> to vector<128xf32>
    %40 = vector.shape_cast %39 : vector<128xf32> to vector<1x128xf32>
    %cst_21 = arith.constant 1.562500e-02 : f32
    %41 = vector.broadcast %cst_21 : f32 to vector<1x128xf32>
    %42 = arith.mulf %40, %41 : vector<1x128xf32>
    %43 = arith.mulf %37, %37 : vector<1x128xf32>
    %44 = arith.subf %42, %43 : vector<1x128xf32>
    %cst_22 = arith.constant 0.000000e+00 : f32
    %45 = vector.broadcast %cst_22 : f32 to vector<1x128xf32>
    %46 = arith.maximumf %44, %45 : vector<1x128xf32>
    %cst_23 = arith.constant 9.99999974E-6 : f32
    %47 = vector.broadcast %cst_23 : f32 to vector<1x128xf32>
    %48 = arith.addf %46, %47 : vector<1x128xf32>
    %49 = math.rsqrt %48 : vector<1x128xf32>
    %50 = arith.mulf %32, %49 : vector<1x128xf32>
    %51 = arith.mulf %37, %50 : vector<1x128xf32>
    %52 = arith.subf %33, %51 : vector<1x128xf32>
    %53 = vector.broadcast %50 : vector<1x128xf32> to vector<64x128xf32>
    %54 = arith.mulf %31, %53 : vector<64x128xf32>
    %55 = vector.broadcast %52 : vector<1x128xf32> to vector<64x128xf32>
    %56 = arith.addf %54, %55 : vector<64x128xf32>
    %cst_24 = arith.constant 0.000000e+00 : f32
    %57 = vector.broadcast %cst_24 : f32 to vector<64x128xf32>
    %58 = arith.maximumf %56, %57 : vector<64x128xf32>
    %c0_25 = arith.constant 0 : index
    %c0_26 = arith.constant 0 : index
    %59 = vector.load %arg4[%c0_25, %c0_26] : memref<128x128xf32, #tpu.memory_space<vmem>>, vector<128x128xf32>
    %cst_27 = arith.constant dense<0.000000e+00> : vector<64x128xf32>
    %60 = tpu.matmul %58, %59, %cst_27 {dimension_numbers = #tpu.dot_dimension_numbers<[1], [0], [0], [1], [0, 0, 1, 1], [], []>} : vector<64x128xf32>, vector<128x128xf32>, vector<64x128xf32> -> vector<64x128xf32>
    %c4 = arith.constant 4 : index
    %c0_28 = arith.constant 0 : index
    %61 = vector.load %arg5[%c4, %c0_28] : memref<8x128xf32, #tpu.memory_space<vmem>>, vector<1x128xf32>
    %62 = vector.broadcast %61 : vector<1x128xf32> to vector<64x128xf32>
    %63 = arith.addf %60, %62 : vector<64x128xf32>
    %64 = arith.mulf %63, %63 : vector<64x128xf32>
    %cst_29 = arith.constant dense<0.000000e+00> : vector<64xf32>
    %65 = vector.multi_reduction <add>, %64, %cst_29 [1] : vector<64x128xf32> to vector<64xf32>
    %66 = vector.shape_cast %65 : vector<64xf32> to vector<64x1xf32>
    %cst_30 = arith.constant 1.000000e-24 : f32
    %67 = vector.broadcast %cst_30 : f32 to vector<64x1xf32>
    %68 = arith.maximumf %66, %67 : vector<64x1xf32>
    %69 = math.rsqrt %68 : vector<64x1xf32>
    %70 = vector.broadcast %69 : vector<64x1xf32> to vector<64x128xf32>
    %71 = arith.mulf %63, %70 : vector<64x128xf32>
    %c0_31 = arith.constant 0 : index
    %c0_32 = arith.constant 0 : index
    %72 = vector.load %arg6[%c0_31, %c0_32] : memref<64x128xf32, #tpu.memory_space<vmem>>, vector<64x128xf32>
    tpu.vector_store %arg6[%c0_31, %c0_32], %71 {strides = array<i32>} : memref<64x128xf32, #tpu.memory_space<vmem>>, vector<64x128xf32>,
    return
  }
  func.func @transform_0(%arg0: i32) -> (i32, i32) {
    %c0_i32 = arith.constant 0 : i32
    %c0_i32_0 = arith.constant 0 : i32
    %c0_i32_1 = arith.constant 0 : i32
    return %c0_i32, %c0_i32_0 : i32, i32
  }
  func.func @transform_1(%arg0: i32) -> (i32, i32) {
    %c0_i32 = arith.constant 0 : i32
    %c0_i32_0 = arith.constant 0 : i32
    %c0_i32_1 = arith.constant 0 : i32
    return %c0_i32, %c0_i32_0 : i32, i32
  }
  func.func @transform_2(%arg0: i32) -> (i32, i32) {
    %c0_i32 = arith.constant 0 : i32
    %c0_i32_0 = arith.constant 0 : i32
    %c0_i32_1 = arith.constant 0 : i32
    return %c0_i32, %c0_i32_0 : i32, i32
  }
  func.func @transform_3(%arg0: i32) -> (i32, i32) {
    %c0_i32 = arith.constant 0 : i32
    %c0_i32_0 = arith.constant 0 : i32
    %c0_i32_1 = arith.constant 0 : i32
    return %c0_i32, %c0_i32_0 : i32, i32
  }
  func.func @transform_4(%arg0: i32) -> (i32, i32) {
    %c0_i32 = arith.constant 0 : i32
    %c0_i32_0 = arith.constant 0 : i32
    %c0_i32_1 = arith.constant 0 : i32
    return %c0_i32, %c0_i32_0 : i32, i32
  }
  func.func @transform_5(%arg0: i32) -> (i32, i32) {
    %c0_i32 = arith.constant 0 : i32
    %c0_i32_0 = arith.constant 0 : i32
    %c0_i32_1 = arith.constant 0 : i32
    return %c0_i32, %c0_i32_0 : i32, i32
  }
}

</mosaic_0001>

<llo_original>
// kernel: fc_net_batch_forward.1
$region0: #{fc_net_batch_forward.1}
  #allocation0 [shape = 'u32[]', space=smem, size = 0x4, offset = 0x4, fixed_abs, tag = 'smem constant byte address 0x4 - core index']
  #allocation1 [shape = 'u32[144,128]{1,0:T(1,128)}', space=vmem, size = 0x12000, scoped, tag = 'internal scratch']
  %s0 = inlined_call_operand.vmem [shape: f32[64,128], index: 0, kind: input, shape index: {}]
  %s1 = inlined_call_operand.vmem [shape: f32[128,128], index: 1, kind: input, shape index: {}]
  %s2 = inlined_call_operand.vmem [shape: f32[128,128], index: 2, kind: input, shape index: {}]
  %s3 = inlined_call_operand.hbm [shape: f32[128,128], index: 3, kind: input, shape index: {}]
  %s4 = inlined_call_operand.vmem [shape: f32[8,128], index: 4, kind: input, shape index: {}]
  %s5 = inlined_call_operand.vmem [shape: f32[64,128], index: 5, kind: output, shape index: {}]
  %s6 = sld [smem:[#allocation0]]
  $region34: #{fc_net_batch_forward.1} parent=0
    _
  %s8 = ssub.s32 1, %s6
  %s9 = scalar_select 0, %s8, %s6
  $region1: #{fc_net_batch_forward.1} parent=0
    #allocation2 [shape = 'u8[65536]{0}', space=vmem, size = 0x10000, scoped, tag = 'input window, operand 3, single buffered']
    #allocation3 [shape = 's32[1]{0}', space=sflag, size = 0x4, scoped, tag = 'scoped memory for fc_net_batch_forward.1']
    %10 = vsyncpa [#allocation3], 0
    // Predicated region
    $region2: #{fc_net_batch_forward.1} parent=1 // pred_check
      _
    $region3: #{fc_net_batch_forward.1} parent=1 // pred_check_branch
      %12 = sbr.rel (0) target = $region5
    $region4: #{fc_net_batch_forward.1} parent=1 // pred_region
      _
    $region5: #{fc_net_batch_forward.1} parent=1 // pred_fallthru
      _
    // Predicated region
    $region6: #{fc_net_batch_forward.1} parent=1 // pred_check
      _
    $region7: #{fc_net_batch_forward.1} parent=1 // pred_check_branch
      %14 = sbr.rel (0) target = $region9
    $region8: #{fc_net_batch_forward.1} parent=1 // pred_region
      _
    $region9: #{fc_net_batch_forward.1} parent=1 // pred_fallthru
      _
    // Predicated region
    $region10: #{fc_net_batch_forward.1} parent=1 // pred_check
      _
    $region11: #{fc_net_batch_forward.1} parent=1 // pred_check_branch
      %16 = sbr.rel (0) target = $region13
    $region12: #{fc_net_batch_forward.1} parent=1 // pred_region
      _
    $region13: #{fc_net_batch_forward.1} parent=1 // pred_fallthru
      _
    // Predicated region
    $region14: #{fc_net_batch_forward.1} parent=1 // pred_check
      _
    $region15: #{fc_net_batch_forward.1} parent=1 // pred_check_branch
      %18 = sbr.rel (0) target = $region17
    $region16: #{fc_net_batch_forward.1} parent=1 // pred_region
      %s20 = ssub.s32 2048, 2048
      %21 = vsyncadd [#allocation3], %s20
      %s22 = sshll.u32 [#allocation2], 4
      %s23 = int_to_ptr.vmem [resolvable:$true] %s22
      %28 = dma.hbm_to_vmem [thread:$0]  %s3, 2048, %s23, [#allocation3], 128, 128, 8
    $region17: #{fc_net_batch_forward.1} parent=1 // pred_fallthru
      _
    // Predicated region
    $region18: #{fc_net_batch_forward.1} parent=1 // pred_check
      _
    $region19: #{fc_net_batch_forward.1} parent=1 // pred_check_branch
      %30 = sbr.rel (0) target = $region21
    $region20: #{fc_net_batch_forward.1} parent=1 // pred_region
      _
    $region21: #{fc_net_batch_forward.1} parent=1 // pred_fallthru
      _
    // Predicated region
    $region22: #{fc_net_batch_forward.1} parent=1 // pred_check
      _
    $region23: #{fc_net_batch_forward.1} parent=1 // pred_check_branch
      %32 = sbr.rel (0) target = $region25
    $region24: #{fc_net_batch_forward.1} parent=1 // pred_region
      %33 = dma.done [#allocation3], 2048
    $region25: #{fc_net_batch_forward.1} parent=1 // pred_fallthru
      _
    %v34 = vld [vmem:[%s0] sm:$0xff]
    %v35 = vld [vmem:[%s0 + $0x8] sm:$0xff]
    %v36 = vld [vmem:[%s0 + $0x10] sm:$0xff]
    %v37 = vld [vmem:[%s0 + $0x18] sm:$0xff]
    %v38 = vld [vmem:[%s0 + $0x20] sm:$0xff]
    %v39 = vld [vmem:[%s0 + $0x28] sm:$0xff]
    %v40 = vld [vmem:[%s0 + $0x30] sm:$0xff]
    %v41 = vld [vmem:[%s0 + $0x38] sm:$0xff]
    %v42 = vld [vmem:[%s1] sm:$0xff]
    %v43 = vld [vmem:[%s1 + $0x8] sm:$0xff]
    %v44 = vld [vmem:[%s1 + $0x10] sm:$0xff]
    %v45 = vld [vmem:[%s1 + $0x18] sm:$0xff]
    %v46 = vld [vmem:[%s1 + $0x20] sm:$0xff]
    %v47 = vld [vmem:[%s1 + $0x28] sm:$0xff]
    %v48 = vld [vmem:[%s1 + $0x30] sm:$0xff]
    %v49 = vld [vmem:[%s1 + $0x38] sm:$0xff]
    %v50 = vld [vmem:[%s1 + $0x40] sm:$0xff]
    %v51 = vld [vmem:[%s1 + $0x48] sm:$0xff]
    %v52 = vld [vmem:[%s1 + $0x50] sm:$0xff]
    %v53 = vld [vmem:[%s1 + $0x58] sm:$0xff]
    %v54 = vld [vmem:[%s1 + $0x60] sm:$0xff]
    %v55 = vld [vmem:[%s1 + $0x68] sm:$0xff]
    %v56 = vld [vmem:[%s1 + $0x70] sm:$0xff]
    %v57 = vld [vmem:[%s1 + $0x78] sm:$0xff]
    %58 = vmatprep.subr.mxu0 0.0
    %59 = vmatpush1.msra.mxu0 %v42
    %60 = vmatprep.subr.mxu0 0.0
    %61 = vmatpush1.msra.mxu0 %v43
    %62 = vmatprep.subr.mxu0 0.0
    %63 = vmatpush1.msra.mxu0 %v44
    %64 = vmatprep.subr.mxu0 0.0
    %65 = vmatpush1.msra.mxu0 %v45
    %66 = vmatprep.subr.mxu0 0.0
    %67 = vmatpush1.msra.mxu0 %v46
    %68 = vmatprep.subr.mxu0 0.0
    %69 = vmatpush1.msra.mxu0 %v47
    %70 = vmatprep.subr.mxu0 0.0
    %71 = vmatpush1.msra.mxu0 %v48
    %72 = vmatprep.subr.mxu0 0.0
    %73 = vmatpush1.msra.mxu0 %v49
    %74 = vmatprep.subr.mxu0 0.0
    %75 = vmatpush1.msra.mxu0 %v50
    %76 = vmatprep.subr.mxu0 0.0
    %77 = vmatpush1.msra.mxu0 %v51
    %78 = vmatprep.subr.mxu0 0.0
    %79 = vmatpush1.msra.mxu0 %v52
    %80 = vmatprep.subr.mxu0 0.0
    %81 = vmatpush1.msra.mxu0 %v53
    %82 = vmatprep.subr.mxu0 0.0
    %83 = vmatpush1.msra.mxu0 %v54
    %84 = vmatprep.subr.mxu0 0.0
    %85 = vmatpush1.msra.mxu0 %v55
    %86 = vmatprep.subr.mxu0 0.0
    %87 = vmatpush1.msra.mxu0 %v56
    %88 = vmatprep.subr.mxu0 0.0
    %89 = vmatpush1.msra.mxu0 %v57
    %90 = vmatprep.subr.mxu0 0.0
    %91 = vmatpush1.msra.mxu0 0.0
    %92 = vmatprep.subr.mxu0 0.0
    %93 = vmatpush1.msra.mxu0 0.0
    %94 = vmatprep.subr.mxu0 0.0
    %95 = vmatpush1.msra.mxu0 0.0
    %96 = vmatprep.subr.mxu0 0.0
    %97 = vmatpush1.msra.mxu0 0.0
    %98 = vmatprep.subr.mxu0 0.0
    %99 = vmatpush1.msra.mxu0 0.0
    %100 = vmatprep.subr.mxu0 0.0
    %101 = vmatpush1.msra.mxu0 0.0
    %102 = vmatprep.subr.mxu0 0.0
    %103 = vmatpush1.msra.mxu0 0.0
    %104 = vmatprep.subr.mxu0 0.0
    %105 = vmatpush1.msra.mxu0 0.0
    %106 = vmatprep.subr.mxu0 0.0
    %107 = vmatpush1.msra.mxu0 0.0
    %108 = vmatprep.subr.mxu0 0.0
    %109 = vmatpush1.msra.mxu0 0.0
    %110 = vmatprep.subr.mxu0 0.0
    %111 = vmatpush1.msra.mxu0 0.0
    %112 = vmatprep.subr.mxu0 0.0
    %113 = vmatpush1.msra.mxu0 0.0
    %114 = vmatprep.subr.mxu0 0.0
    %115 = vmatpush1.msra.mxu0 0.0
    %116 = vmatprep.subr.mxu0 0.0
    %117 = vmatpush1.msra.mxu0 0.0
    %118 = vmatprep.subr.mxu0 0.0
    %119 = vmatpush1.msra.mxu0 0.0
    %120 = vmatprep.subr.mxu0 0.0
    %121 = vmatpush1.msra.mxu0 0.0
    %122 = vmatprep.mubr.f32.mxu0 0.0
    %123 = vmatmul.mubr.f32.gmra.mrb[0].mxu0 %v34
    %v124 = vpop.f32.mrb[0].mxu0
    %v125 = vadd.f32 0.0, %v124
    %v126 = vpop.f32.mrb[0].mxu0
    %127 = vmatprep.mubr.f32.mxu0 0.0
    %128 = vmatmul.mubr.f32.gmra.mrb[0].mxu0 %v35
    %v129 = vpop.f32.mrb[0].mxu0
    %v130 = vadd.f32 0.0, %v129
    %v131 = vpop.f32.mrb[0].mxu0
    %132 = vmatprep.mubr.f32.mxu0 0.0
    %133 = vmatmul.mubr.f32.gmra.mrb[0].mxu0 %v36
    %v134 = vpop.f32.mrb[0].mxu0
    %v135 = vadd.f32 0.0, %v134
    %v136 = vpop.f32.mrb[0].mxu0
    %137 = vmatprep.mubr.f32.mxu0 0.0
    %138 = vmatmul.mubr.f32.gmra.mrb[0].mxu0 %v37
    %v139 = vpop.f32.mrb[0].mxu0
    %v140 = vadd.f32 0.0, %v139
    %v141 = vpop.f32.mrb[0].mxu0
    %142 = vmatprep.mubr.f32.mxu0 0.0
    %143 = vmatmul.mubr.f32.gmra.mrb[0].mxu0 %v38
    %v144 = vpop.f32.mrb[0].mxu0
    %v145 = vadd.f32 0.0, %v144
    %v146 = vpop.f32.mrb[0].mxu0
    %147 = vmatprep.mubr.f32.mxu0 0.0
    %148 = vmatmul.mubr.f32.gmra.mrb[0].mxu0 %v39
    %v149 = vpop.f32.mrb[0].mxu0
    %v150 = vadd.f32 0.0, %v149
    %v151 = vpop.f32.mrb[0].mxu0
    %152 = vmatprep.mubr.f32.mxu0 0.0
    %153 = vmatmul.mubr.f32.gmra.mrb[0].mxu0 %v40
    %v154 = vpop.f32.mrb[0].mxu0
    %v155 = vadd.f32 0.0, %v154
    %v156 = vpop.f32.mrb[0].mxu0
    %157 = vmatprep.mubr.f32.mxu0 0.0
    %158 = vmatmul.mubr.f32.gmra.mrb[0].mxu0 %v41
    %v159 = vpop.f32.mrb[0].mxu0
    %v160 = vadd.f32 0.0, %v159
    %v161 = vpop.f32.mrb[0].mxu0
    %162 = vdwg.mxu0
    %v163 = vld [vmem:[%s4] sm:$0x1]
    %v164 = vld [vmem:[%s4 + $0x1] sm:$0x1]
    %v165 = vadd.f32 %v125, %v130
    %v166 = vadd.f32 %v165, %v135
    %v167 = vadd.f32 %v166, %v140
    %v168 = vadd.f32 %v167, %v145
    %v169 = vadd.f32 %v168, %v150
    %v170 = vadd.f32 %v169, %v155
    %v171 = vadd.f32 %v170, %v160
    %v172 = vrot.slane %v171, 4
    %v173 = vadd.f32 %v171, %v172
    %v174 = vrot.slane %v173, 2
    %v175 = vadd.f32 %v173, %v174
    %v176 = vrot.slane %v175, 1
    %v177 = vadd.f32 %v175, %v176
    %v178 = vmul.f32 %v177, 0.015625
    %v179 = vmul.f32 %v125, %v125
    %v180 = vmul.f32 %v130, %v130
    %v181 = vmul.f32 %v135, %v135
    %v182 = vmul.f32 %v140, %v140
    %v183 = vmul.f32 %v145, %v145
    %v184 = vmul.f32 %v150, %v150
    %v185 = vmul.f32 %v155, %v155
    %v186 = vmul.f32 %v160, %v160
    %v187 = vadd.f32 %v179, %v180
    %v188 = vadd.f32 %v187, %v181
    %v189 = vadd.f32 %v188, %v182
    %v190 = vadd.f32 %v189, %v183
    %v191 = vadd.f32 %v190, %v184
    %v192 = vadd.f32 %v191, %v185
    %v193 = vadd.f32 %v192, %v186
    %v194 = vrot.slane %v193, 4
    %v195 = vadd.f32 %v193, %v194
    %v196 = vrot.slane %v195, 2
    %v197 = vadd.f32 %v195, %v196
    %v198 = vrot.slane %v197, 1
    %v199 = vadd.f32 %v197, %v198
    %v200 = vmul.f32 %v199, 0.015625
    %v201 = vmul.f32 %v178, %v178
    %v202 = vsub.f32 %v200, %v201
    %v203 = vmax.f32 %v202, 0.0
    %v204 = vadd.f32 %v203, 1e-05
    %v205 = vrsqrt.pop %v204
    %v206 = vmul.f32 %v163, %v205
    %v207 = vmul.f32 %v178, %v206
    %v208 = vsub.f32 %v164, %v207
    %v209 = vlaneseq
    %v210 = vshrl.u32 %v209, 7
    %v211 = vsub.s32 0, %v210
    %v212 = vrot.slane %v206, %v211
    %v213 = vmul.f32 %v125, %v212
    %v214 = vmul.f32 %v130, %v212
    %v215 = vmul.f32 %v135, %v212
    %v216 = vmul.f32 %v140, %v212
    %v217 = vmul.f32 %v145, %v212
    %v218 = vmul.f32 %v150, %v212
    %v219 = vmul.f32 %v155, %v212
    %v220 = vmul.f32 %v160, %v212
    %v221 = vlaneseq
    %v222 = vshrl.u32 %v221, 7
    %v223 = vsub.s32 0, %v222
    %v224 = vrot.slane %v208, %v223
    %v225 = vadd.f32 %v213, %v224
    %v226 = vadd.f32 %v214, %v224
    %v227 = vadd.f32 %v215, %v224
    %v228 = vadd.f32 %v216, %v224
    %v229 = vadd.f32 %v217, %v224
    %v230 = vadd.f32 %v218, %v224
    %v231 = vadd.f32 %v219, %v224
    %v232 = vadd.f32 %v220, %v224
    %v233 = vmax.f32 %v225, 0.0
    %v234 = vmax.f32 %v226, 0.0
    %v235 = vmax.f32 %v227, 0.0
    %v236 = vmax.f32 %v228, 0.0
    %v237 = vmax.f32 %v229, 0.0
    %v238 = vmax.f32 %v230, 0.0
    %v239 = vmax.f32 %v231, 0.0
    %v240 = vmax.f32 %v232, 0.0
    %v241 = vld [vmem:[%s2] sm:$0xff]
    %v242 = vld [vmem:[%s2 + $0x8] sm:$0xff]
    %v243 = vld [vmem:[%s2 + $0x10] sm:$0xff]
    %v244 = vld [vmem:[%s2 + $0x18] sm:$0xff]
    %v245 = vld [vmem:[%s2 + $0x20] sm:$0xff]
    %v246 = vld [vmem:[%s2 + $0x28] sm:$0xff]
    %v247 = vld [vmem:[%s2 + $0x30] sm:$0xff]
    %v248 = vld [vmem:[%s2 + $0x38] sm:$0xff]
    %v249 = vld [vmem:[%s2 + $0x40] sm:$0xff]
    %v250 = vld [vmem:[%s2 + $0x48] sm:$0xff]
    %v251 = vld [vmem:[%s2 + $0x50] sm:$0xff]
    %v252 = vld [vmem:[%s2 + $0x58] sm:$0xff]
    %v253 = vld [vmem:[%s2 + $0x60] sm:$0xff]
    %v254 = vld [vmem:[%s2 + $0x68] sm:$0xff]
    %v255 = vld [vmem:[%s2 + $0x70] sm:$0xff]
    %v256 = vld [vmem:[%s2 + $0x78] sm:$0xff]
    %257 = vmatprep.subr.mxu0 0.0
    %258 = vmatpush1.msra.mxu0 %v241
    %259 = vmatprep.subr.mxu0 0.0
    %260 = vmatpush1.msra.mxu0 %v242
    %261 = vmatprep.subr.mxu0 0.0
    %262 = vmatpush1.msra.mxu0 %v243
    %263 = vmatprep.subr.mxu0 0.0
    %264 = vmatpush1.msra.mxu0 %v244
    %265 = vmatprep.subr.mxu0 0.0
    %266 = vmatpush1.msra.mxu0 %v245
    %267 = vmatprep.subr.mxu0 0.0
    %268 = vmatpush1.msra.mxu0 %v246
    %269 = vmatprep.subr.mxu0 0.0
    %270 = vmatpush1.msra.mxu0 %v247
    %271 = vmatprep.subr.mxu0 0.0
    %272 = vmatpush1.msra.mxu0 %v248
    %273 = vmatprep.subr.mxu0 0.0
    %274 = vmatpush1.msra.mxu0 %v249
    %275 = vmatprep.subr.mxu0 0.0
    %276 = vmatpush1.msra.mxu0 %v250
    %277 = vmatprep.subr.mxu0 0.0
    %278 = vmatpush1.msra.mxu0 %v251
    %279 = vmatprep.subr.mxu0 0.0
    %280 = vmatpush1.msra.mxu0 %v252
    %281 = vmatprep.subr.mxu0 0.0
    %282 = vmatpush1.msra.mxu0 %v253
    %283 = vmatprep.subr.mxu0 0.0
    %284 = vmatpush1.msra.mxu0 %v254
    %285 = vmatprep.subr.mxu0 0.0
    %286 = vmatpush1.msra.mxu0 %v255
    %287 = vmatprep.subr.mxu0 0.0
    %288 = vmatpush1.msra.mxu0 %v256
    %289 = vmatprep.subr.mxu0 0.0
    %290 = vmatpush1.msra.mxu0 0.0
    %291 = vmatprep.subr.mxu0 0.0
    %292 = vmatpush1.msra.mxu0 0.0
    %293 = vmatprep.subr.mxu0 0.0
    %294 = vmatpush1.msra.mxu0 0.0
    %295 = vmatprep.subr.mxu0 0.0
    %296 = vmatpush1.msra.mxu0 0.0
    %297 = vmatprep.subr.mxu0 0.0
    %298 = vmatpush1.msra.mxu0 0.0
    %299 = vmatprep.subr.mxu0 0.0
    %300 = vmatpush1.msra.mxu0 0.0
    %301 = vmatprep.subr.mxu0 0.0
    %302 = vmatpush1.msra.mxu0 0.0
    %303 = vmatprep.subr.mxu0 0.0
    %304 = vmatpush1.msra.mxu0 0.0
    %305 = vmatprep.subr.mxu0 0.0
    %306 = vmatpush1.msra.mxu0 0.0
    %307 = vmatprep.subr.mxu0 0.0
    %308 = vmatpush1.msra.mxu0 0.0
    %309 = vmatprep.subr.mxu0 0.0
    %310 = vmatpush1.msra.mxu0 0.0
    %311 = vmatprep.subr.mxu0 0.0
    %312 = vmatpush1.msra.mxu0 0.0
    %313 = vmatprep.subr.mxu0 0.0
    %314 = vmatpush1.msra.mxu0 0.0
    %315 = vmatprep.subr.mxu0 0.0
    %316 = vmatpush1.msra.mxu0 0.0
    %317 = vmatprep.subr.mxu0 0.0
    %318 = vmatpush1.msra.mxu0 0.0
    %319 = vmatprep.subr.mxu0 0.0
    %320 = vmatpush1.msra.mxu0 0.0
    %321 = vmatprep.mubr.f32.mxu0 0.0
    %322 = vmatmul.mubr.f32.gmra.mrb[0].mxu0 %v233
    %v323 = vpop.f32.mrb[0].mxu0
    %v324 = vadd.f32 0.0, %v323
    %v325 = vpop.f32.mrb[0].mxu0
    %326 = vmatprep.mubr.f32.mxu0 0.0
    %327 = vmatmul.mubr.f32.gmra.mrb[0].mxu0 %v234
    %v328 = vpop.f32.mrb[0].mxu0
    %v329 = vadd.f32 0.0, %v328
    %v330 = vpop.f32.mrb[0].mxu0
    %331 = vmatprep.mubr.f32.mxu0 0.0
    %332 = vmatmul.mubr.f32.gmra.mrb[0].mxu0 %v235
    %v333 = vpop.f32.mrb[0].mxu0
    %v334 = vadd.f32 0.0, %v333
    %v335 = vpop.f32.mrb[0].mxu0
    %336 = vmatprep.mubr.f32.mxu0 0.0
    %337 = vmatmul.mubr.f32.gmra.mrb[0].mxu0 %v236
    %v338 = vpop.f32.mrb[0].mxu0
    %v339 = vadd.f32 0.0, %v338
    %v340 = vpop.f32.mrb[0].mxu0
    %341 = vmatprep.mubr.f32.mxu0 0.0
    %342 = vmatmul.mubr.f32.gmra.mrb[0].mxu0 %v237
    %v343 = vpop.f32.mrb[0].mxu0
    %v344 = vadd.f32 0.0, %v343
    %v345 = vpop.f32.mrb[0].mxu0
    %346 = vmatprep.mubr.f32.mxu0 0.0
    %347 = vmatmul.mubr.f32.gmra.mrb[0].mxu0 %v238
    %v348 = vpop.f32.mrb[0].mxu0
    %v349 = vadd.f32 0.0, %v348
    %v350 = vpop.f32.mrb[0].mxu0
    %351 = vmatprep.mubr.f32.mxu0 0.0
    %352 = vmatmul.mubr.f32.gmra.mrb[0].mxu0 %v239
    %v353 = vpop.f32.mrb[0].mxu0
    %v354 = vadd.f32 0.0, %v353
    %v355 = vpop.f32.mrb[0].mxu0
    %356 = vmatprep.mubr.f32.mxu0 0.0
    %357 = vmatmul.mubr.f32.gmra.mrb[0].mxu0 %v240
    %v358 = vpop.f32.mrb[0].mxu0
    %v359 = vadd.f32 0.0, %v358
    %v360 = vpop.f32.mrb[0].mxu0
    %361 = vdwg.mxu0
    %v362 = vld [vmem:[%s4 + $0x2] sm:$0x1]
    %v363 = vld [vmem:[%s4 + $0x3] sm:$0x1]
    %v364 = vadd.f32 %v324, %v329
    %v365 = vadd.f32 %v364, %v334
    %v366 = vadd.f32 %v365, %v339
    %v367 = vadd.f32 %v366, %v344
    %v368 = vadd.f32 %v367, %v349
    %v369 = vadd.f32 %v368, %v354
    %v370 = vadd.f32 %v369, %v359
    %v371 = vrot.slane %v370, 4
    %v372 = vadd.f32 %v370, %v371
    %v373 = vrot.slane %v372, 2
    %v374 = vadd.f32 %v372, %v373
    %v375 = vrot.slane %v374, 1
    %v376 = vadd.f32 %v374, %v375
    %v377 = vmul.f32 %v376, 0.015625
    %v378 = vmul.f32 %v324, %v324
    %v379 = vmul.f32 %v329, %v329
    %v380 = vmul.f32 %v334, %v334
    %v381 = vmul.f32 %v339, %v339
    %v382 = vmul.f32 %v344, %v344
    %v383 = vmul.f32 %v349, %v349
    %v384 = vmul.f32 %v354, %v354
    %v385 = vmul.f32 %v359, %v359
    %v386 = vadd.f32 %v378, %v379
    %v387 = vadd.f32 %v386, %v380
    %v388 = vadd.f32 %v387, %v381
    %v389 = vadd.f32 %v388, %v382
    %v390 = vadd.f32 %v389, %v383
    %v391 = vadd.f32 %v390, %v384
    %v392 = vadd.f32 %v391, %v385
    %v393 = vrot.slane %v392, 4
    %v394 = vadd.f32 %v392, %v393
    %v395 = vrot.slane %v394, 2
    %v396 = vadd.f32 %v394, %v395
    %v397 = vrot.slane %v396, 1
    %v398 = vadd.f32 %v396, %v397
    %v399 = vmul.f32 %v398, 0.015625
    %v400 = vmul.f32 %v377, %v377
    %v401 = vsub.f32 %v399, %v400
    %v402 = vmax.f32 %v401, 0.0
    %v403 = vadd.f32 %v402, 1e-05
    %v404 = vrsqrt.pop %v403
    %v405 = vmul.f32 %v362, %v404
    %v406 = vmul.f32 %v377, %v405
    %v407 = vsub.f32 %v363, %v406
    %v408 = vlaneseq
    %v409 = vshrl.u32 %v408, 7
    %v410 = vsub.s32 0, %v409
    %v411 = vrot.slane %v405, %v410
    %v412 = vmul.f32 %v324, %v411
    %v413 = vmul.f32 %v329, %v411
    %v414 = vmul.f32 %v334, %v411
    %v415 = vmul.f32 %v339, %v411
    %v416 = vmul.f32 %v344, %v411
    %v417 = vmul.f32 %v349, %v411
    %v418 = vmul.f32 %v354, %v411
    %v419 = vmul.f32 %v359, %v411
    %v420 = vlaneseq
    %v421 = vshrl.u32 %v420, 7
    %v422 = vsub.s32 0, %v421
    %v423 = vrot.slane %v407, %v422
    %v424 = vadd.f32 %v412, %v423
    %v425 = vadd.f32 %v413, %v423
    %v426 = vadd.f32 %v414, %v423
    %v427 = vadd.f32 %v415, %v423
    %v428 = vadd.f32 %v416, %v423
    %v429 = vadd.f32 %v417, %v423
    %v430 = vadd.f32 %v418, %v423
    %v431 = vadd.f32 %v419, %v423
    %v432 = vmax.f32 %v424, 0.0
    %v433 = vmax.f32 %v425, 0.0
    %v434 = vmax.f32 %v426, 0.0
    %v435 = vmax.f32 %v427, 0.0
    %v436 = vmax.f32 %v428, 0.0
    %v437 = vmax.f32 %v429, 0.0
    %v438 = vmax.f32 %v430, 0.0
    %v439 = vmax.f32 %v431, 0.0
    %v440 = vld [vmem:[#allocation2] sm:$0xff]
    %v441 = vld [vmem:[#allocation2 + $0x8] sm:$0xff]
    %v442 = vld [vmem:[#allocation2 + $0x10] sm:$0xff]
    %v443 = vld [vmem:[#allocation2 + $0x18] sm:$0xff]
    %v444 = vld [vmem:[#allocation2 + $0x20] sm:$0xff]
    %v445 = vld [vmem:[#allocation2 + $0x28] sm:$0xff]
    %v446 = vld [vmem:[#allocation2 + $0x30] sm:$0xff]
    %v447 = vld [vmem:[#allocation2 + $0x38] sm:$0xff]
    %v448 = vld [vmem:[#allocation2 + $0x40] sm:$0xff]
    %v449 = vld [vmem:[#allocation2 + $0x48] sm:$0xff]
    %v450 = vld [vmem:[#allocation2 + $0x50] sm:$0xff]
    %v451 = vld [vmem:[#allocation2 + $0x58] sm:$0xff]
    %v452 = vld [vmem:[#allocation2 + $0x60] sm:$0xff]
    %v453 = vld [vmem:[#allocation2 + $0x68] sm:$0xff]
    %v454 = vld [vmem:[#allocation2 + $0x70] sm:$0xff]
    %v455 = vld [vmem:[#allocation2 + $0x78] sm:$0xff]
    %v456 = vld [vmem:[%s4 + $0x4] sm:$0x1]
    %v457 = vlaneseq
    %v458 = vshrl.u32 %v457, 7
    %v459 = vsub.s32 0, %v458
    %v460 = vrot.slane %v456, %v459
    %461 = vmatprep.subr.mxu0 0.0
    %462 = vmatpush1.msra.mxu0 %v440
    %463 = vmatprep.subr.mxu0 0.0
    %464 = vmatpush1.msra.mxu0 %v441
    %465 = vmatprep.subr.mxu0 0.0
    %466 = vmatpush1.msra.mxu0 %v442
    %467 = vmatprep.subr.mxu0 0.0
    %468 = vmatpush1.msra.mxu0 %v443
    %469 = vmatprep.subr.mxu0 0.0
    %470 = vmatpush1.msra.mxu0 %v444
    %471 = vmatprep.subr.mxu0 0.0
    %472 = vmatpush1.msra.mxu0 %v445
    %473 = vmatprep.subr.mxu0 0.0
    %474 = vmatpush1.msra.mxu0 %v446
    %475 = vmatprep.subr.mxu0 0.0
    %476 = vmatpush1.msra.mxu0 %v447
    %477 = vmatprep.subr.mxu0 0.0
    %478 = vmatpush1.msra.mxu0 %v448
    %479 = vmatprep.subr.mxu0 0.0
    %480 = vmatpush1.msra.mxu0 %v449
    %481 = vmatprep.subr.mxu0 0.0
    %482 = vmatpush1.msra.mxu0 %v450
    %483 = vmatprep.subr.mxu0 0.0
    %484 = vmatpush1.msra.mxu0 %v451
    %485 = vmatprep.subr.mxu0 0.0
    %486 = vmatpush1.msra.mxu0 %v452
    %487 = vmatprep.subr.mxu0 0.0
    %488 = vmatpush1.msra.mxu0 %v453
    %489 = vmatprep.subr.mxu0 0.0
    %490 = vmatpush1.msra.mxu0 %v454
    %491 = vmatprep.subr.mxu0 0.0
    %492 = vmatpush1.msra.mxu0 %v455
    %493 = vmatprep.subr.mxu0 0.0
    %494 = vmatpush1.msra.mxu0 0.0
    %495 = vmatprep.subr.mxu0 0.0
    %496 = vmatpush1.msra.mxu0 0.0
    %497 = vmatprep.subr.mxu0 0.0
    %498 = vmatpush1.msra.mxu0 0.0
    %499 = vmatprep.subr.mxu0 0.0
    %500 = vmatpush1.msra.mxu0 0.0
    %501 = vmatprep.subr.mxu0 0.0
    %502 = vmatpush1.msra.mxu0 0.0
    %503 = vmatprep.subr.mxu0 0.0
    %504 = vmatpush1.msra.mxu0 0.0
    %505 = vmatprep.subr.mxu0 0.0
    %506 = vmatpush1.msra.mxu0 0.0
    %507 = vmatprep.subr.mxu0 0.0
    %508 = vmatpush1.msra.mxu0 0.0
    %509 = vmatprep.subr.mxu0 0.0
    %510 = vmatpush1.msra.mxu0 0.0
    %511 = vmatprep.subr.mxu0 0.0
    %512 = vmatpush1.msra.mxu0 0.0
    %513 = vmatprep.subr.mxu0 0.0
    %514 = vmatpush1.msra.mxu0 0.0
    %515 = vmatprep.subr.mxu0 0.0
    %516 = vmatpush1.msra.mxu0 0.0
    %517 = vmatprep.subr.mxu0 0.0
    %518 = vmatpush1.msra.mxu0 0.0
    %519 = vmatprep.subr.mxu0 0.0
    %520 = vmatpush1.msra.mxu0 0.0
    %521 = vmatprep.subr.mxu0 0.0
    %522 = vmatpush1.msra.mxu0 0.0
    %523 = vmatprep.subr.mxu0 0.0
    %524 = vmatpush1.msra.mxu0 0.0
    %525 = vmatprep.mubr.f32.mxu0 0.0
    %526 = vmatmul.mubr.f32.gmra.mrb[0].mxu0 %v432
    %v527 = vpop.f32.mrb[0].mxu0
    %v528 = vadd.f32 %v460, %v527
    %v529 = vpop.f32.mrb[0].mxu0
    %530 = vmatprep.mubr.f32.mxu0 0.0
    %531 = vmatmul.mubr.f32.gmra.mrb[0].mxu0 %v433
    %v532 = vpop.f32.mrb[0].mxu0
    %v533 = vadd.f32 %v460, %v532
    %v534 = vpop.f32.mrb[0].mxu0
    %535 = vmatprep.mubr.f32.mxu0 0.0
    %536 = vmatmul.mubr.f32.gmra.mrb[0].mxu0 %v434
    %v537 = vpop.f32.mrb[0].mxu0
    %v538 = vadd.f32 %v460, %v537
    %v539 = vpop.f32.mrb[0].mxu0
    %540 = vmatprep.mubr.f32.mxu0 0.0
    %541 = vmatmul.mubr.f32.gmra.mrb[0].mxu0 %v435
    %v542 = vpop.f32.mrb[0].mxu0
    %v543 = vadd.f32 %v460, %v542
    %v544 = vpop.f32.mrb[0].mxu0
    %545 = vmatprep.mubr.f32.mxu0 0.0
    %546 = vmatmul.mubr.f32.gmra.mrb[0].mxu0 %v436
    %v547 = vpop.f32.mrb[0].mxu0
    %v548 = vadd.f32 %v460, %v547
    %v549 = vpop.f32.mrb[0].mxu0
    %550 = vmatprep.mubr.f32.mxu0 0.0
    %551 = vmatmul.mubr.f32.gmra.mrb[0].mxu0 %v437
    %v552 = vpop.f32.mrb[0].mxu0
    %v553 = vadd.f32 %v460, %v552
    %v554 = vpop.f32.mrb[0].mxu0
    %555 = vmatprep.mubr.f32.mxu0 0.0
    %556 = vmatmul.mubr.f32.gmra.mrb[0].mxu0 %v438
    %v557 = vpop.f32.mrb[0].mxu0
    %v558 = vadd.f32 %v460, %v557
    %v559 = vpop.f32.mrb[0].mxu0
    %560 = vmatprep.mubr.f32.mxu0 0.0
    %561 = vmatmul.mubr.f32.gmra.mrb[0].mxu0 %v439
    %v562 = vpop.f32.mrb[0].mxu0
    %v563 = vadd.f32 %v460, %v562
    %v564 = vpop.f32.mrb[0].mxu0
    %565 = vdwg.mxu0
    %v566 = vmul.f32 %v528, %v528
    %v567 = vmul.f32 %v533, %v533
    %v568 = vmul.f32 %v538, %v538
    %v569 = vmul.f32 %v543, %v543
    %v570 = vmul.f32 %v548, %v548
    %v571 = vmul.f32 %v553, %v553
    %v572 = vmul.f32 %v558, %v558
    %v573 = vmul.f32 %v563, %v563
    %574 = vadd.xlane.f32.xlu0 %v566
    %v575 = vpop.xlane.xlu0 %574
    %576 = vadd.xlane.f32.xlu0 %v567
    %v577 = vpop.xlane.xlu0 %576
    %578 = vadd.xlane.f32.xlu0 %v568
    %v579 = vpop.xlane.xlu0 %578
    %580 = vadd.xlane.f32.xlu0 %v569
    %v581 = vpop.xlane.xlu0 %580
    %582 = vadd.xlane.f32.xlu0 %v570
    %v583 = vpop.xlane.xlu0 %582
    %584 = vadd.xlane.f32.xlu0 %v571
    %v585 = vpop.xlane.xlu0 %584
    %586 = vadd.xlane.f32.xlu0 %v572
    %v587 = vpop.xlane.xlu0 %586
    %588 = vadd.xlane.f32.xlu0 %v573
    %v589 = vpop.xlane.xlu0 %588
    %v590 = vmax.f32 %v575, 1e-24
    %v591 = vmax.f32 %v577, 1e-24
    %v592 = vmax.f32 %v579, 1e-24
    %v593 = vmax.f32 %v581, 1e-24
    %v594 = vmax.f32 %v583, 1e-24
    %v595 = vmax.f32 %v585, 1e-24
    %v596 = vmax.f32 %v587, 1e-24
    %v597 = vmax.f32 %v589, 1e-24
    %v598 = vrsqrt.pop %v590
    %v599 = vrsqrt.pop %v591
    %v600 = vrsqrt.pop %v592
    %v601 = vrsqrt.pop %v593
    %v602 = vrsqrt.pop %v594
    %v603 = vrsqrt.pop %v595
    %v604 = vrsqrt.pop %v596
    %v605 = vrsqrt.pop %v597
    %v606 = vmul.f32 %v528, %v598
    %v607 = vmul.f32 %v533, %v599
    %v608 = vmul.f32 %v538, %v600
    %v609 = vmul.f32 %v543, %v601
    %v610 = vmul.f32 %v548, %v602
    %v611 = vmul.f32 %v553, %v603
    %v612 = vmul.f32 %v558, %v604
    %v613 = vmul.f32 %v563, %v605
    %614 = vst [vmem:[%s5] sm:$0xff] %v606
    %615 = vst [vmem:[%s5 + $0x8] sm:$0xff] %v607
    %616 = vst [vmem:[%s5 + $0x10] sm:$0xff] %v608
    %617 = vst [vmem:[%s5 + $0x18] sm:$0xff] %v609
    %618 = vst [vmem:[%s5 + $0x20] sm:$0xff] %v610
    %619 = vst [vmem:[%s5 + $0x28] sm:$0xff] %v611
    %620 = vst [vmem:[%s5 + $0x30] sm:$0xff] %v612
    %621 = vst [vmem:[%s5 + $0x38] sm:$0xff] %v613
    // Predicated region
    $region26: #{fc_net_batch_forward.1} parent=1 // pred_check
      _
    $region27: #{fc_net_batch_forward.1} parent=1 // pred_check_branch
      %623 = sbr.rel (0) target = $region29
    $region28: #{fc_net_batch_forward.1} parent=1 // pred_region
      _
    $region29: #{fc_net_batch_forward.1} parent=1 // pred_fallthru
      _
    // Predicated region
    $region30: #{fc_net_batch_forward.1} parent=1 // pred_check
      _
    $region31: #{fc_net_batch_forward.1} parent=1 // pred_check_branch
      %625 = sbr.rel (0) target = $region33
    $region32: #{fc_net_batch_forward.1} parent=1 // pred_region
      _
    $region33: #{fc_net_batch_forward.1} parent=1 // pred_fallthru
      _
    %626 = vsyncpa [#allocation3], 1

</llo_original>
